<compile_context>
chip_gen: v5e
topology: v5e:2x2
jax: 0.10.0
libtpu: 0.0.40
codegen_flags: <defaults>
</compile_context>

<pallas_src>
import functools

import jax
import jax.numpy as jnp
from jax.experimental import pallas as pl
from jax.experimental.pallas import tpu as pltpu

_IN = 28 * 28        # 784
_OUT = 10
_N_MXU = 128         # weight is padded to a full 128-wide MXU tile


def _netlin_kernel(x_ref, w_ref, b_ref, o_ref):
    # x_ref: [TB, 784]  w_ref: [784, 128]  b_ref: [1, 10]  o_ref: [TB, 10]
    acc = jnp.dot(x_ref[...], w_ref[...],
                  preferred_element_type=jnp.float32)          # MXU, f32 acc
    logits = acc[:, :_OUT] + b_ref[...]                        # drop padded cols

    # Numerically stable log_softmax along dim=1, in f32.
    m = jnp.max(logits, axis=-1, keepdims=True)
    shifted = logits - m
    lse = jnp.log(jnp.sum(jnp.exp(shifted), axis=-1, keepdims=True))
    o_ref[...] = (shifted - lse).astype(o_ref.dtype)


def _round_up(x, m):
    return (x + m - 1) // m * m


@functools.partial(jax.jit, static_argnames=("tile_b",))
def netlin_forward(x, weight, bias, *, tile_b=2048):
    """x: [..., 28, 28] (any leading dims); weight: [10, 784]; bias: [10]."""
    x2d = x.reshape(-1, _IN)                                   # x.view(-1, 784)
    # Stream x in its incoming dtype (no extra HBM cast pass). Only fall back
    # to f32 for dtypes the MXU path doesn't want (ints, f64, ...).
    if x2d.dtype not in (jnp.bfloat16, jnp.float32):
        x2d = x2d.astype(jnp.float32)
    B = x2d.shape[0]

    # Batch tile: multiple of 8 (sublane rule), capped at tile_b rows.
    TB = min(int(tile_b), _round_up(B, 8))
    num_tiles = pl.cdiv(B, TB)
    # v7x megacore: if the whole batch fits one tile but is big enough to
    # split, halve the tile so both TensorCores get work.
    if num_tiles == 1 and B > 16:
        TB = _round_up(pl.cdiv(B, 2), 8)
        num_tiles = pl.cdiv(B, TB)

    # Weight padded to a lane-dense 128-wide MXU tile (tiny, read once,
    # resident in VMEM). Bias stays narrow (added after the slice).
    w_pad = jnp.pad(weight.T.astype(x2d.dtype),
                    ((0, 0), (0, _N_MXU - _OUT)))              # [784, 128]
    b2d = bias.reshape(1, _OUT).astype(jnp.float32)            # [1, 10]

    out = pl.pallas_call(
        _netlin_kernel,
        out_shape=jax.ShapeDtypeStruct((B, _OUT), jnp.float32),
        grid=(num_tiles,),
        in_specs=[
            pl.BlockSpec((TB, _IN), lambda i: (i, 0)),          # streamed x tiles
            pl.BlockSpec((_IN, _N_MXU), lambda i: (0, 0)),      # resident weight
            pl.BlockSpec((1, _OUT), lambda i: (0, 0)),          # resident bias
        ],
        out_specs=pl.BlockSpec((TB, _OUT), lambda i: (i, 0)),   # narrow writeback
        compiler_params=pltpu.CompilerParams(
            dimension_semantics=("parallel",),                  # megacore on v7x
            vmem_limit_bytes=48 * 1024 * 1024,                  # past v5e's 16 MiB default
        ),
    )(x2d, w_pad, b2d)

    return out


def init_params(key):
    """Deterministic init matching nn.Linear(784, 10) shapes/init scheme."""
    k_w, k_b = jax.random.split(key)
    bound = 1.0 / jnp.sqrt(784.0)
    weight = jax.random.uniform(k_w, (10, _IN), jnp.float32, -bound, bound)
    bias = jax.random.uniform(k_b, (10,), jnp.float32, -bound, bound)
    return weight, bias


if __name__ == "__main__":
    key = jax.random.PRNGKey(0)
    k_x, k_p = jax.random.split(key)

    batch = 8
    x = jax.random.normal(k_x, (batch, 1, 28, 28), jnp.float32)  # NCHW, like MNIST
    weight, bias = init_params(k_p)

    out = jax.block_until_ready(netlin_forward(x, weight, bias))
    assert out.shape == (batch, 10)

    # log_softmax rows exponentiate-sum to ~1 by construction.
    row_sums = jnp.sum(jnp.exp(out), axis=1)
    assert jnp.allclose(row_sums, jnp.ones_like(row_sums), atol=1e-4)

    # Compare against a pure-JAX f32 reference.
    ref = jax.nn.log_softmax(x.reshape(batch, -1) @ weight.T + bias, axis=-1)
    assert jnp.allclose(out, ref, atol=1e-2), float(jnp.max(jnp.abs(out - ref)))

    print("KERNEL_OK")
</pallas_src>

<mosaic_0001>
module attributes {stable_mosaic.version = 11 : i64} {
  func.func @_netlin_kernel(%arg0: i32, %arg1: memref<8x784xf32, #tpu.memory_space<vmem>>, %arg2: memref<784x128xf32, #tpu.memory_space<vmem>>, %arg3: memref<1x10xf32, #tpu.memory_space<vmem>>, %arg4: memref<8x10xf32, #tpu.memory_space<vmem>>) attributes {dimension_semantics = [#tpu.dimension_semantics<parallel>], iteration_bounds = array<i64: 1>, scalar_prefetch = 0 : i64, scratch_operands = 0 : i64, tpu.core_type = #tpu.core_type<tc>, window_params = [{transform_indices = @transform_0, window_bounds = array<i64: 8, 784>}, {pipeline_mode = #tpu.pipeline_mode<synchronous>, transform_indices = @transform_1, window_bounds = array<i64: 784, 128>}, {pipeline_mode = #tpu.pipeline_mode<synchronous>, transform_indices = @transform_2, window_bounds = array<i64: 1, 10>}, {transform_indices = @transform_3, window_bounds = array<i64: 8, 10>}]} {
    %c0 = arith.constant 0 : index
    %c0_0 = arith.constant 0 : index
    %0 = vector.load %arg1[%c0, %c0_0] : memref<8x784xf32, #tpu.memory_space<vmem>>, vector<8x784xf32>
    %c0_1 = arith.constant 0 : index
    %c0_2 = arith.constant 0 : index
    %1 = vector.load %arg2[%c0_1, %c0_2] : memref<784x128xf32, #tpu.memory_space<vmem>>, vector<784x128xf32>
    %cst = arith.constant dense<0.000000e+00> : vector<8x128xf32>
    %2 = tpu.matmul %0, %1, %cst {dimension_numbers = #tpu.dot_dimension_numbers<[1], [0], [0], [1], [0, 0, 1, 1], [], []>} : vector<8x784xf32>, vector<784x128xf32>, vector<8x128xf32> -> vector<8x128xf32>
    %3 = vector.extract_strided_slice %2 {offsets = [0, 0], sizes = [8, 10], strides = [1, 1]} : vector<8x128xf32> to vector<8x10xf32>
    %c0_3 = arith.constant 0 : index
    %c0_4 = arith.constant 0 : index
    %4 = vector.load %arg3[%c0_3, %c0_4] : memref<1x10xf32, #tpu.memory_space<vmem>>, vector<1x10xf32>
    %5 = vector.broadcast %4 : vector<1x10xf32> to vector<8x10xf32>
    %6 = arith.addf %3, %5 : vector<8x10xf32>
    %cst_5 = arith.constant dense<0xFF800000> : vector<8xf32>
    %7 = vector.multi_reduction <maximumf>, %6, %cst_5 [1] : vector<8x10xf32> to vector<8xf32>
    %8 = vector.shape_cast %7 : vector<8xf32> to vector<8x1xf32>
    %9 = vector.broadcast %8 : vector<8x1xf32> to vector<8x10xf32>
    %10 = arith.subf %6, %9 : vector<8x10xf32>
    %11 = math.exp %10 : vector<8x10xf32>
    %cst_6 = arith.constant dense<0.000000e+00> : vector<8xf32>
    %12 = vector.multi_reduction <add>, %11, %cst_6 [1] : vector<8x10xf32> to vector<8xf32>
    %13 = vector.shape_cast %12 : vector<8xf32> to vector<8x1xf32>
    %14 = math.log %13 : vector<8x1xf32>
    %15 = vector.broadcast %14 : vector<8x1xf32> to vector<8x10xf32>
    %16 = arith.subf %10, %15 : vector<8x10xf32>
    %c0_7 = arith.constant 0 : index
    %c0_8 = arith.constant 0 : index
    %17 = vector.load %arg4[%c0_7, %c0_8] : memref<8x10xf32, #tpu.memory_space<vmem>>, vector<8x10xf32>
    tpu.vector_store %arg4[%c0_7, %c0_8], %16 {strides = array<i32>} : memref<8x10xf32, #tpu.memory_space<vmem>>, vector<8x10xf32>,
    return
  }
  func.func @transform_0(%arg0: i32) -> (i32, i32) {
    %c0_i32 = arith.constant 0 : i32
    %c0_i32_0 = arith.constant 0 : i32
    return %arg0, %c0_i32 : i32, i32
  }
  func.func @transform_1(%arg0: i32) -> (i32, i32) {
    %c0_i32 = arith.constant 0 : i32
    %c0_i32_0 = arith.constant 0 : i32
    %c0_i32_1 = arith.constant 0 : i32
    return %c0_i32, %c0_i32_0 : i32, i32
  }
  func.func @transform_2(%arg0: i32) -> (i32, i32) {
    %c0_i32 = arith.constant 0 : i32
    %c0_i32_0 = arith.constant 0 : i32
    %c0_i32_1 = arith.constant 0 : i32
    return %c0_i32, %c0_i32_0 : i32, i32
  }
  func.func @transform_3(%arg0: i32) -> (i32, i32) {
    %c0_i32 = arith.constant 0 : i32
    %c0_i32_0 = arith.constant 0 : i32
    return %arg0, %c0_i32 : i32, i32
  }
}

</mosaic_0001>

<llo_original>
// kernel: netlin_forward.1
$region0: #{netlin_forward.1}
  #allocation0 [shape = 'u32[]', space=smem, size = 0x4, offset = 0x4, fixed_abs, tag = 'smem constant byte address 0x4 - core index']
  #allocation1 [shape = 'u32[72,128]{1,0:T(1,128)}', space=vmem, size = 0x9000, scoped, tag = 'internal scratch']
  %s0 = inlined_call_operand.vmem [shape: f32[8,784], index: 0, kind: input, shape index: {}]
  %s1 = inlined_call_operand.vmem [shape: f32[784,128], index: 1, kind: input, shape index: {}]
  %s2 = inlined_call_operand.vmem [shape: f32[1,10], index: 2, kind: input, shape index: {}]
  %s3 = inlined_call_operand.hbm [shape: f32[8,10], index: 3, kind: output, shape index: {}]
  %s4 = sld [smem:[#allocation0]]
  $region22: #{netlin_forward.1} parent=0
    _
  %s6 = ssub.s32 1, %s4
  %s7 = scalar_select 0, %s6, %s4
  $region1: #{netlin_forward.1} parent=0
    #allocation2 [shape = 'u8[4096]{0}', space=vmem, size = 0x1000, scoped, tag = 'output window, operand 0, single buffered']
    #allocation3 [shape = 's32[1]{0}', space=sflag, size = 0x4, scoped, tag = 'scoped memory for netlin_forward.1']
    %8 = vsyncpa [#allocation3], 0
    // Predicated region
    $region2: #{netlin_forward.1} parent=1 // pred_check
      _
    $region3: #{netlin_forward.1} parent=1 // pred_check_branch
      %10 = sbr.rel (0) target = $region5
    $region4: #{netlin_forward.1} parent=1 // pred_region
      _
    $region5: #{netlin_forward.1} parent=1 // pred_fallthru
      _
    // Predicated region
    $region6: #{netlin_forward.1} parent=1 // pred_check
      _
    $region7: #{netlin_forward.1} parent=1 // pred_check_branch
      %12 = sbr.rel (0) target = $region9
    $region8: #{netlin_forward.1} parent=1 // pred_region
      _
    $region9: #{netlin_forward.1} parent=1 // pred_fallthru
      _
    // Predicated region
    $region10: #{netlin_forward.1} parent=1 // pred_check
      _
    $region11: #{netlin_forward.1} parent=1 // pred_check_branch
      %14 = sbr.rel (0) target = $region13
    $region12: #{netlin_forward.1} parent=1 // pred_region
      _
    $region13: #{netlin_forward.1} parent=1 // pred_fallthru
      _
    %v15 = vld [vmem:[%s0] sm:$0xff]
    %v16 = vld [vmem:[%s0 + $0x8] sm:$0xff]
    %v17 = vld [vmem:[%s0 + $0x10] sm:$0xff]
    %v18 = vld [vmem:[%s0 + $0x18] sm:$0xff]
    %v19 = vld [vmem:[%s0 + $0x20] sm:$0xff]
    %v20 = vld [vmem:[%s0 + $0x28] sm:$0xff]
    %v21 = vld [vmem:[%s0 + $0x30] sm:$0xff]
    %v22 = vld [vmem:[%s1] sm:$0xff]
    %v23 = vld [vmem:[%s1 + $0x8] sm:$0xff]
    %v24 = vld [vmem:[%s1 + $0x10] sm:$0xff]
    %v25 = vld [vmem:[%s1 + $0x18] sm:$0xff]
    %v26 = vld [vmem:[%s1 + $0x20] sm:$0xff]
    %v27 = vld [vmem:[%s1 + $0x28] sm:$0xff]
    %v28 = vld [vmem:[%s1 + $0x30] sm:$0xff]
    %v29 = vld [vmem:[%s1 + $0x38] sm:$0xff]
    %v30 = vld [vmem:[%s1 + $0x40] sm:$0xff]
    %v31 = vld [vmem:[%s1 + $0x48] sm:$0xff]
    %v32 = vld [vmem:[%s1 + $0x50] sm:$0xff]
    %v33 = vld [vmem:[%s1 + $0x58] sm:$0xff]
    %v34 = vld [vmem:[%s1 + $0x60] sm:$0xff]
    %v35 = vld [vmem:[%s1 + $0x68] sm:$0xff]
    %v36 = vld [vmem:[%s1 + $0x70] sm:$0xff]
    %v37 = vld [vmem:[%s1 + $0x78] sm:$0xff]
    %v38 = vld [vmem:[%s1 + $0x80] sm:$0xff]
    %v39 = vld [vmem:[%s1 + $0x88] sm:$0xff]
    %v40 = vld [vmem:[%s1 + $0x90] sm:$0xff]
    %v41 = vld [vmem:[%s1 + $0x98] sm:$0xff]
    %v42 = vld [vmem:[%s1 + $0xa0] sm:$0xff]
    %v43 = vld [vmem:[%s1 + $0xa8] sm:$0xff]
    %v44 = vld [vmem:[%s1 + $0xb0] sm:$0xff]
    %v45 = vld [vmem:[%s1 + $0xb8] sm:$0xff]
    %v46 = vld [vmem:[%s1 + $0xc0] sm:$0xff]
    %v47 = vld [vmem:[%s1 + $0xc8] sm:$0xff]
    %v48 = vld [vmem:[%s1 + $0xd0] sm:$0xff]
    %v49 = vld [vmem:[%s1 + $0xd8] sm:$0xff]
    %v50 = vld [vmem:[%s1 + $0xe0] sm:$0xff]
    %v51 = vld [vmem:[%s1 + $0xe8] sm:$0xff]
    %v52 = vld [vmem:[%s1 + $0xf0] sm:$0xff]
    %v53 = vld [vmem:[%s1 + $0xf8] sm:$0xff]
    %v54 = vld [vmem:[%s1 + $0x100] sm:$0xff]
    %v55 = vld [vmem:[%s1 + $0x108] sm:$0xff]
    %v56 = vld [vmem:[%s1 + $0x110] sm:$0xff]
    %v57 = vld [vmem:[%s1 + $0x118] sm:$0xff]
    %v58 = vld [vmem:[%s1 + $0x120] sm:$0xff]
    %v59 = vld [vmem:[%s1 + $0x128] sm:$0xff]
    %v60 = vld [vmem:[%s1 + $0x130] sm:$0xff]
    %v61 = vld [vmem:[%s1 + $0x138] sm:$0xff]
    %v62 = vld [vmem:[%s1 + $0x140] sm:$0xff]
    %v63 = vld [vmem:[%s1 + $0x148] sm:$0xff]
    %v64 = vld [vmem:[%s1 + $0x150] sm:$0xff]
    %v65 = vld [vmem:[%s1 + $0x158] sm:$0xff]
    %v66 = vld [vmem:[%s1 + $0x160] sm:$0xff]
    %v67 = vld [vmem:[%s1 + $0x168] sm:$0xff]
    %v68 = vld [vmem:[%s1 + $0x170] sm:$0xff]
    %v69 = vld [vmem:[%s1 + $0x178] sm:$0xff]
    %v70 = vld [vmem:[%s1 + $0x180] sm:$0xff]
    %v71 = vld [vmem:[%s1 + $0x188] sm:$0xff]
    %v72 = vld [vmem:[%s1 + $0x190] sm:$0xff]
    %v73 = vld [vmem:[%s1 + $0x198] sm:$0xff]
    %v74 = vld [vmem:[%s1 + $0x1a0] sm:$0xff]
    %v75 = vld [vmem:[%s1 + $0x1a8] sm:$0xff]
    %v76 = vld [vmem:[%s1 + $0x1b0] sm:$0xff]
    %v77 = vld [vmem:[%s1 + $0x1b8] sm:$0xff]
    %v78 = vld [vmem:[%s1 + $0x1c0] sm:$0xff]
    %v79 = vld [vmem:[%s1 + $0x1c8] sm:$0xff]
    %v80 = vld [vmem:[%s1 + $0x1d0] sm:$0xff]
    %v81 = vld [vmem:[%s1 + $0x1d8] sm:$0xff]
    %v82 = vld [vmem:[%s1 + $0x1e0] sm:$0xff]
    %v83 = vld [vmem:[%s1 + $0x1e8] sm:$0xff]
    %v84 = vld [vmem:[%s1 + $0x1f0] sm:$0xff]
    %v85 = vld [vmem:[%s1 + $0x1f8] sm:$0xff]
    %v86 = vld [vmem:[%s1 + $0x200] sm:$0xff]
    %v87 = vld [vmem:[%s1 + $0x208] sm:$0xff]
    %v88 = vld [vmem:[%s1 + $0x210] sm:$0xff]
    %v89 = vld [vmem:[%s1 + $0x218] sm:$0xff]
    %v90 = vld [vmem:[%s1 + $0x220] sm:$0xff]
    %v91 = vld [vmem:[%s1 + $0x228] sm:$0xff]
    %v92 = vld [vmem:[%s1 + $0x230] sm:$0xff]
    %v93 = vld [vmem:[%s1 + $0x238] sm:$0xff]
    %v94 = vld [vmem:[%s1 + $0x240] sm:$0xff]
    %v95 = vld [vmem:[%s1 + $0x248] sm:$0xff]
    %v96 = vld [vmem:[%s1 + $0x250] sm:$0xff]
    %v97 = vld [vmem:[%s1 + $0x258] sm:$0xff]
    %v98 = vld [vmem:[%s1 + $0x260] sm:$0xff]
    %v99 = vld [vmem:[%s1 + $0x268] sm:$0xff]
    %v100 = vld [vmem:[%s1 + $0x270] sm:$0xff]
    %v101 = vld [vmem:[%s1 + $0x278] sm:$0xff]
    %v102 = vld [vmem:[%s1 + $0x280] sm:$0xff]
    %v103 = vld [vmem:[%s1 + $0x288] sm:$0xff]
    %v104 = vld [vmem:[%s1 + $0x290] sm:$0xff]
    %v105 = vld [vmem:[%s1 + $0x298] sm:$0xff]
    %v106 = vld [vmem:[%s1 + $0x2a0] sm:$0xff]
    %v107 = vld [vmem:[%s1 + $0x2a8] sm:$0xff]
    %v108 = vld [vmem:[%s1 + $0x2b0] sm:$0xff]
    %v109 = vld [vmem:[%s1 + $0x2b8] sm:$0xff]
    %v110 = vld [vmem:[%s1 + $0x2c0] sm:$0xff]
    %v111 = vld [vmem:[%s1 + $0x2c8] sm:$0xff]
    %v112 = vld [vmem:[%s1 + $0x2d0] sm:$0xff]
    %v113 = vld [vmem:[%s1 + $0x2d8] sm:$0xff]
    %v114 = vld [vmem:[%s1 + $0x2e0] sm:$0xff]
    %v115 = vld [vmem:[%s1 + $0x2e8] sm:$0xff]
    %v116 = vld [vmem:[%s1 + $0x2f0] sm:$0xff]
    %v117 = vld [vmem:[%s1 + $0x2f8] sm:$0xff]
    %v118 = vld [vmem:[%s1 + $0x300] sm:$0xff]
    %v119 = vld [vmem:[%s1 + $0x308] sm:$0xff]
    %vm120 = vcmask 130048
    %v122 = vsel %vm120, %v21, 0
    %124 = vmatpush.msra.mxu0 %v37
    %125 = vmatpush.msra.mxu0 %v36
    %126 = vmatpush.msra.mxu0 %v35
    %127 = vmatpush.msra.mxu0 %v34
    %128 = vmatpush.msra.mxu0 %v33
    %129 = vmatpush.msra.mxu0 %v32
    %130 = vmatpush.msra.mxu0 %v31
    %131 = vmatpush.msra.mxu0 %v30
    %132 = vmatpush.msra.mxu0 %v29
    %133 = vmatpush.msra.mxu0 %v28
    %134 = vmatpush.msra.mxu0 %v27
    %135 = vmatpush.msra.mxu0 %v26
    %136 = vmatpush.msra.mxu0 %v25
    %137 = vmatpush.msra.mxu0 %v24
    %138 = vmatpush.msra.mxu0 %v23
    %139 = vmatpush.msra.mxu0 %v22
    %140 = vmatmul.f32.gmra.mxu0 %v15
    %v141 = vpop.f32.mrf.mxu0
    %v142 = vadd.f32 0.0, %v141
    %143 = vdwg.mxu0
    %144 = vmatpush.msra.mxu0 %v53
    %145 = vmatpush.msra.mxu0 %v52
    %146 = vmatpush.msra.mxu0 %v51
    %147 = vmatpush.msra.mxu0 %v50
    %148 = vmatpush.msra.mxu0 %v49
    %149 = vmatpush.msra.mxu0 %v48
    %150 = vmatpush.msra.mxu0 %v47
    %151 = vmatpush.msra.mxu0 %v46
    %152 = vmatpush.msra.mxu0 %v45
    %153 = vmatpush.msra.mxu0 %v44
    %154 = vmatpush.msra.mxu0 %v43
    %155 = vmatpush.msra.mxu0 %v42
    %156 = vmatpush.msra.mxu0 %v41
    %157 = vmatpush.msra.mxu0 %v40
    %158 = vmatpush.msra.mxu0 %v39
    %159 = vmatpush.msra.mxu0 %v38
    %160 = vmatmul.f32.gmra.mxu0 %v16
    %v161 = vpop.f32.mrf.mxu0
    %v162 = vadd.f32 %v142, %v161
    %163 = vdwg.mxu0
    %164 = vmatpush.msra.mxu0 %v69
    %165 = vmatpush.msra.mxu0 %v68
    %166 = vmatpush.msra.mxu0 %v67
    %167 = vmatpush.msra.mxu0 %v66
    %168 = vmatpush.msra.mxu0 %v65
    %169 = vmatpush.msra.mxu0 %v64
    %170 = vmatpush.msra.mxu0 %v63
    %171 = vmatpush.msra.mxu0 %v62
    %172 = vmatpush.msra.mxu0 %v61
    %173 = vmatpush.msra.mxu0 %v60
    %174 = vmatpush.msra.mxu0 %v59
    %175 = vmatpush.msra.mxu0 %v58
    %176 = vmatpush.msra.mxu0 %v57
    %177 = vmatpush.msra.mxu0 %v56
    %178 = vmatpush.msra.mxu0 %v55
    %179 = vmatpush.msra.mxu0 %v54
    %180 = vmatmul.f32.gmra.mxu0 %v17
    %v181 = vpop.f32.mrf.mxu0
    %v182 = vadd.f32 %v162, %v181
    %183 = vdwg.mxu0
    %184 = vmatpush.msra.mxu0 %v85
    %185 = vmatpush.msra.mxu0 %v84
    %186 = vmatpush.msra.mxu0 %v83
    %187 = vmatpush.msra.mxu0 %v82
    %188 = vmatpush.msra.mxu0 %v81
    %189 = vmatpush.msra.mxu0 %v80
    %190 = vmatpush.msra.mxu0 %v79
    %191 = vmatpush.msra.mxu0 %v78
    %192 = vmatpush.msra.mxu0 %v77
    %193 = vmatpush.msra.mxu0 %v76
    %194 = vmatpush.msra.mxu0 %v75
    %195 = vmatpush.msra.mxu0 %v74
    %196 = vmatpush.msra.mxu0 %v73
    %197 = vmatpush.msra.mxu0 %v72
    %198 = vmatpush.msra.mxu0 %v71
    %199 = vmatpush.msra.mxu0 %v70
    %200 = vmatmul.f32.gmra.mxu0 %v18
    %v201 = vpop.f32.mrf.mxu0
    %v202 = vadd.f32 %v182, %v201
    %203 = vdwg.mxu0
    %204 = vmatpush.msra.mxu0 %v101
    %205 = vmatpush.msra.mxu0 %v100
    %206 = vmatpush.msra.mxu0 %v99
    %207 = vmatpush.msra.mxu0 %v98
    %208 = vmatpush.msra.mxu0 %v97
    %209 = vmatpush.msra.mxu0 %v96
    %210 = vmatpush.msra.mxu0 %v95
    %211 = vmatpush.msra.mxu0 %v94
    %212 = vmatpush.msra.mxu0 %v93
    %213 = vmatpush.msra.mxu0 %v92
    %214 = vmatpush.msra.mxu0 %v91
    %215 = vmatpush.msra.mxu0 %v90
    %216 = vmatpush.msra.mxu0 %v89
    %217 = vmatpush.msra.mxu0 %v88
    %218 = vmatpush.msra.mxu0 %v87
    %219 = vmatpush.msra.mxu0 %v86
    %220 = vmatmul.f32.gmra.mxu0 %v19
    %v221 = vpop.f32.mrf.mxu0
    %v222 = vadd.f32 %v202, %v221
    %223 = vdwg.mxu0
    %224 = vmatpush.msra.mxu0 %v117
    %225 = vmatpush.msra.mxu0 %v116
    %226 = vmatpush.msra.mxu0 %v115
    %227 = vmatpush.msra.mxu0 %v114
    %228 = vmatpush.msra.mxu0 %v113
    %229 = vmatpush.msra.mxu0 %v112
    %230 = vmatpush.msra.mxu0 %v111
    %231 = vmatpush.msra.mxu0 %v110
    %232 = vmatpush.msra.mxu0 %v109
    %233 = vmatpush.msra.mxu0 %v108
    %234 = vmatpush.msra.mxu0 %v107
    %235 = vmatpush.msra.mxu0 %v106
    %236 = vmatpush.msra.mxu0 %v105
    %237 = vmatpush.msra.mxu0 %v104
    %238 = vmatpush.msra.mxu0 %v103
    %239 = vmatpush.msra.mxu0 %v102
    %240 = vmatmul.f32.gmra.mxu0 %v20
    %v241 = vpop.f32.mrf.mxu0
    %v242 = vadd.f32 %v222, %v241
    %243 = vdwg.mxu0
    %244 = vmatpush.msra.mxu0 0.0
    %245 = vmatpush.msra.mxu0 0.0
    %246 = vmatpush.msra.mxu0 0.0
    %247 = vmatpush.msra.mxu0 0.0
    %248 = vmatpush.msra.mxu0 0.0
    %249 = vmatpush.msra.mxu0 0.0
    %250 = vmatpush.msra.mxu0 0.0
    %251 = vmatpush.msra.mxu0 0.0
    %252 = vmatpush.msra.mxu0 0.0
    %253 = vmatpush.msra.mxu0 0.0
    %254 = vmatpush.msra.mxu0 0.0
    %255 = vmatpush.msra.mxu0 0.0
    %256 = vmatpush.msra.mxu0 0.0
    %257 = vmatpush.msra.mxu0 0.0
    %258 = vmatpush.msra.mxu0 %v119
    %259 = vmatpush.msra.mxu0 %v118
    %260 = vmatmul.f32.gmra.mxu0 %v122
    %v261 = vpop.f32.mrf.mxu0
    %v262 = vadd.f32 %v242, %v261
    %263 = vdwg.mxu0
    %v264 = vld [vmem:[%s2] sm:$0x1]
    %v266 = vperm.slane %v264, 0
    %v268 = vadd.f32 %v262, %v266
    %vm269 = vcmask 80896
    %v270 = vsel %vm269, %v268, -inf
    %271 = vmax.xlane.f32.xlu0 %v270
    %v272 = vpop.xlane.xlu0 %271
    %v273 = vsub.f32 %v268, %v272
    %v274 = vmul.f32 %v273, 1.442695
    %v275 = vpow.pop %v274
    %v276 = vsel %vm269, %v275, 0.0
    %277 = vadd.xlane.f32.xlu0 %v276
    %v278 = vpop.xlane.xlu0 %277
    %v279 = vlog2.pop %v278
    %v280 = vmul.f32 %v279, 0.6931472
    %v281 = vsub.f32 %v273, %v280
    %282 = vst.msk [vmem:[#allocation2] sm:$0xff] %vm269, %v281
    // Predicated region
    $region14: #{netlin_forward.1} parent=1 // pred_check
      _
    $region15: #{netlin_forward.1} parent=1 // pred_check_branch
      %284 = sbr.rel (0) target = $region17
    $region16: #{netlin_forward.1} parent=1 // pred_region
      %286 = vsyncadd [#allocation3], 0
      %s288 = sshll.u32 [#allocation2], 4
      %s289 = int_to_ptr.vmem [resolvable:$true] %s288
      %s290 = sshll.u32 %s3, 4
      %s291 = int_to_ptr.hbm [resolvable:$true] %s290
      %293 = dma.vmem_to_hbm [thread:$0]  %s289, 128, %s291, [#allocation3]
    $region17: #{netlin_forward.1} parent=1 // pred_fallthru
      _
    // Predicated region
    $region18: #{netlin_forward.1} parent=1 // pred_check
      _
    $region19: #{netlin_forward.1} parent=1 // pred_check_branch
      %295 = sbr.rel (0) target = $region21
    $region20: #{netlin_forward.1} parent=1 // pred_region
      %297 = dma.done [#allocation3], 128
    $region21: #{netlin_forward.1} parent=1 // pred_fallthru
      _
    %298 = vsyncpa [#allocation3], 1

</llo_original>
